<compile_context>
chip_gen: v6e
topology: v6e:2x2x1
jax: 0.10.0
libtpu: 0.0.40
codegen_flags: <defaults>
</compile_context>

<pallas_src>
import warnings

import jax
import jax.numpy as jnp
import numpy as np
from jax.experimental import pallas as pl
from jax.experimental.pallas import tpu as pltpu

_LANE = 128
_SUBLANE = 8


def _round_up(x, m):
    return ((x + m - 1) // m) * m


def _pool_pred_kernel(batch_ref, node_ref, w_ref, b_ref, out_ref,
                      acc_ref, cnt_ref):
    # batch_ref: [1, tile_n]   int32  graph id per node (-1 for padded nodes)
    # node_ref : [tile_n, Dp]  node dtype (f32/bf16)  node representations
    # w_ref    : [Dp, Tp]      f32    graph_pred_linear.weight^T (zero padded)
    # b_ref    : [1, Tp]       f32    graph_pred_linear.bias     (zero padded)
    # out_ref  : [tile_b, Tp]  f32    per-graph predictions
    # acc_ref  : [tile_b, Dp]  f32    segment-sum accumulator
    # cnt_ref  : [tile_b, 128] f32    per-graph node counts (broadcast on lanes)
    k = pl.program_id(1)
    n_k = pl.num_programs(1)
    tile_b = acc_ref.shape[0]

    @pl.when(k == 0)
    def _init():
        acc_ref[...] = jnp.zeros_like(acc_ref)
        cnt_ref[...] = jnp.zeros_like(cnt_ref)

    # One-hot membership for this (b-tile, n-tile).  Padded nodes carry batch
    # id -1 and never match; padded graph rows never match real batch ids.
    base = pl.program_id(0) * tile_b
    graph_ids = base + jax.lax.broadcasted_iota(jnp.int32, (tile_b, 1), 0)
    one_hot = graph_ids == batch_ref[...]                    # [tile_b, tile_n]

    # Per-graph node counts: XLU lane-reduce, hidden under the node DMA.
    cnt_ref[...] += jnp.sum(one_hot.astype(jnp.float32), axis=-1, keepdims=True)

    # Segment-sum pooling on the MXU, accumulating in f32 (bf16 stream OK).
    acc_ref[...] += jnp.dot(one_hot.astype(node_ref.dtype), node_ref[...],
                            preferred_element_type=jnp.float32)

    @pl.when(k == n_k - 1)
    def _finalize():
        counts = cnt_ref[...][:, 0:1]                        # [tile_b, 1]
        inv = pl.reciprocal(jnp.maximum(counts, 1.0), approx=False)
        graph_repr = acc_ref[...] * inv                      # mean pool
        pred = jnp.dot(graph_repr, w_ref[...],
                       preferred_element_type=jnp.float32) + b_ref[...]
        out_ref[...] = pred.astype(out_ref.dtype)


def gnn_graphpred_forward(node_repr, batch, weight, bias, num_graphs,
                          *, tile_n=4096, tile_b=None):
    """Fused global_mean_pool + graph_pred_linear.

    node_repr: [N, D] float (f32 or bf16) - output of the external molecule_model
    batch    : [N]    int   graph id per node
    weight   : [T, D] float torch nn.Linear layout
    bias     : [T]    float
    """
    N, D = node_repr.shape
    T = weight.shape[0]
    B = int(num_graphs)

    Dp = _round_up(D, _LANE)
    Tp = _round_up(T, _LANE)
    Bp = _round_up(B, _SUBLANE)

    # --- tile_n: biggest lane-aligned tile under a node double-buffer budget.
    # NOTE(v7x): faster HBM per TC => step overhead is relatively larger; keep
    # tile_n >= 4096 for Dp <= ~512 (budget clamp only bites for huge Dp).
    itemsize = int(jnp.dtype(node_repr.dtype).itemsize)
    node_budget = 8 * 2**20                       # bytes for the 2 node buffers
    tile_n = min(int(tile_n), max(node_budget // (2 * Dp * itemsize), _LANE))
    tile_n = max(_round_up(min(tile_n, _round_up(N, _LANE)), _LANE), _LANE)
    Np = _round_up(N, tile_n)
    n_k = Np // tile_n

    # --- B tiling: keep a single b-tile; splitting B re-streams all nodes ---
    if tile_b is None:
        tile_b = Bp
    tile_b = _round_up(min(int(tile_b), Bp), _SUBLANE)
    Bp = _round_up(Bp, tile_b)
    n_b = Bp // tile_b
    if n_b > 1:
        warnings.warn("n_b > 1: every extra B-tile re-streams the entire node "
                      "tensor from HBM; shrink tile_n before shrinking tile_b.")

    # --- inputs: pad only when necessary (zero-copy when already aligned) ---
    if (Np, Dp) == (N, D):
        node_p = node_repr                         # zero wrapper-side copies
    else:
        node_p = jnp.zeros((Np, Dp), node_repr.dtype).at[:N, :D].set(node_repr)

    batch_p = jnp.full((1, Np), -1, dtype=jnp.int32)
    batch_p = batch_p.at[0, :N].set(batch.astype(jnp.int32))

    # graph_pred_linear params, transposed + zero padded (padded rows/cols are
    # zero so padded feature lanes contribute nothing).
    w_p = jnp.zeros((Dp, Tp), jnp.float32)
    w_p = w_p.at[:D, :T].set(jnp.transpose(weight).astype(jnp.float32))
    b_p = jnp.zeros((1, Tp), jnp.float32)
    b_p = b_p.at[0, :T].set(bias.astype(jnp.float32))

    # --- explicit scoped-VMEM limit (v5e default is only 16 MiB) ------------
    vmem_need = (2 * tile_n * Dp * itemsize        # node tiles (double buffer)
                 + 2 * tile_n * 4                  # batch-id tiles
                 + 2 * (Dp * Tp + Tp) * 4          # W^T + bias (double buffer)
                 + 2 * tile_b * Tp * 4             # output tile
                 + tile_b * (Dp + _LANE) * 4)      # acc + count scratch
    vmem_limit = int(min(max(2 * vmem_need, 16 * 2**20), 48 * 2**20))

    out_p = pl.pallas_call(
        _pool_pred_kernel,
        out_shape=jax.ShapeDtypeStruct((Bp, Tp), jnp.float32),
        grid_spec=pltpu.PrefetchScalarGridSpec(
            num_scalar_prefetch=0,
            grid=(n_b, n_k),
            in_specs=[
                pl.BlockSpec((1, tile_n), lambda b, k: (0, k)),    # batch ids
                pl.BlockSpec((tile_n, Dp), lambda b, k: (k, 0)),   # node tile
                pl.BlockSpec((Dp, Tp), lambda b, k: (0, 0)),       # W^T
                pl.BlockSpec((1, Tp), lambda b, k: (0, 0)),        # bias
            ],
            out_specs=pl.BlockSpec((tile_b, Tp), lambda b, k: (b, 0)),
            scratch_shapes=[pltpu.VMEM((tile_b, Dp), jnp.float32),
                            pltpu.VMEM((tile_b, _LANE), jnp.float32)],
        ),
        compiler_params=pltpu.CompilerParams(
            dimension_semantics=("parallel", "arbitrary"),
            vmem_limit_bytes=vmem_limit),
    )(batch_p, node_p, w_p, b_p)

    return out_p[:B, :T]


def reference_forward(node_repr, batch, weight, bias, num_graphs):
    """Pure-JAX reference: global_mean_pool + Linear."""
    one_hot = (jnp.arange(num_graphs)[:, None] == batch[None, :]).astype(jnp.float32)
    graph_sum = one_hot @ node_repr.astype(jnp.float32)
    counts = jnp.maximum(one_hot.sum(axis=1, keepdims=True), 1.0)
    graph_repr = graph_sum * (1.0 / counts)
    return graph_repr @ weight.T + bias[None, :]


if __name__ == "__main__":
    # param: num_layer=5, emb_dim=32, JK='last', graph_pooling='mean', num_tasks=8
    emb_dim = 32
    num_tasks = 8
    num_nodes = 64
    num_graphs = 8

    key = jax.random.PRNGKey(0)
    k_node, k_w, k_b, k_batch = jax.random.split(key, 4)

    # node representations (output of the external molecule_model)
    node_repr = jax.random.normal(k_node, (num_nodes, emb_dim), dtype=jnp.float32)

    # graph_pred_linear parameters (JK != 'concat' -> bias=True)
    bound = 1.0 / np.sqrt(emb_dim)
    graph_pred_w = jax.random.uniform(k_w, (num_tasks, emb_dim),
                                      minval=-bound, maxval=bound,
                                      dtype=jnp.float32)
    graph_pred_b = jax.random.uniform(k_b, (num_tasks,),
                                      minval=-bound, maxval=bound,
                                      dtype=jnp.float32)

    # batch assignment: sorted graph ids, every graph non-empty
    batch = jnp.sort(jax.random.randint(k_batch, (num_nodes - num_graphs,),
                                        0, num_graphs, dtype=jnp.int32))
    batch = jnp.sort(jnp.concatenate([batch, jnp.arange(num_graphs, dtype=jnp.int32)]))

    # f32 node stream (exact vs reference).
    out = gnn_graphpred_forward(node_repr, batch, graph_pred_w, graph_pred_b,
                                num_graphs)
    out = jax.block_until_ready(out)
    ref = reference_forward(node_repr, batch, graph_pred_w, graph_pred_b,
                            num_graphs)
    np.testing.assert_allclose(np.asarray(out), np.asarray(ref),
                               rtol=1e-5, atol=1e-5)

    # bf16 node stream (what a bf16 molecule_model would emit): half the HBM
    # bytes; accumulation stays f32.
    node_bf16 = node_repr.astype(jnp.bfloat16)
    out_bf16 = jax.block_until_ready(
        gnn_graphpred_forward(node_bf16, batch, graph_pred_w, graph_pred_b,
                              num_graphs))
    ref_bf16 = reference_forward(node_bf16.astype(jnp.float32), batch,
                                 graph_pred_w, graph_pred_b, num_graphs)
    np.testing.assert_allclose(np.asarray(out_bf16), np.asarray(ref_bf16),
                               rtol=1e-3, atol=1e-3)

    print("KERNEL_OK")
</pallas_src>

<mosaic_0001>
module attributes {stable_mosaic.version = 11 : i64} {
  func.func @_pool_pred_kernel(%arg0: i32, %arg1: i32, %arg2: memref<1x128xi32, #tpu.memory_space<vmem>>, %arg3: memref<128x128xf32, #tpu.memory_space<vmem>>, %arg4: memref<128x128xf32, #tpu.memory_space<vmem>>, %arg5: memref<1x128xf32, #tpu.memory_space<vmem>>, %arg6: memref<8x128xf32, #tpu.memory_space<vmem>>, %arg7: memref<8x128xf32, #tpu.memory_space<vmem>>, %arg8: memref<8x128xf32, #tpu.memory_space<vmem>>) attributes {dimension_semantics = [#tpu.dimension_semantics<parallel>, #tpu.dimension_semantics<arbitrary>], iteration_bounds = array<i64: 1, 1>, scalar_prefetch = 0 : i64, scratch_operands = 2 : i64, tpu.core_type = #tpu.core_type<tc>, window_params = [{transform_indices = @transform_0, window_bounds = array<i64: 1, 128>}, {transform_indices = @transform_1, window_bounds = array<i64: 128, 128>}, {pipeline_mode = #tpu.pipeline_mode<synchronous>, transform_indices = @transform_2, window_bounds = array<i64: 128, 128>}, {pipeline_mode = #tpu.pipeline_mode<synchronous>, transform_indices = @transform_3, window_bounds = array<i64: 1, 128>}, {transform_indices = @transform_4, window_bounds = array<i64: 8, 128>}]} {
    %c0_i32 = arith.constant 0 : i32
    %0 = arith.cmpi eq, %arg1, %c0_i32 : i32
    %1 = arith.extui %0 : i1 to i32
    %c0_i32_0 = arith.constant 0 : i32
    %2 = arith.cmpi ne, %1, %c0_i32_0 : i32
    scf.if %2 {
      %cst_15 = arith.constant 0.000000e+00 : f32
      %29 = vector.broadcast %cst_15 : f32 to vector<8x128xf32>
      %c0_16 = arith.constant 0 : index
      %c0_17 = arith.constant 0 : index
      %30 = vector.load %arg7[%c0_16, %c0_17] : memref<8x128xf32, #tpu.memory_space<vmem>>, vector<8x128xf32>
      tpu.vector_store %arg7[%c0_16, %c0_17], %29 {strides = array<i32>} : memref<8x128xf32, #tpu.memory_space<vmem>>, vector<8x128xf32>,
      %cst_18 = arith.constant 0.000000e+00 : f32
      %31 = vector.broadcast %cst_18 : f32 to vector<8x128xf32>
      %c0_19 = arith.constant 0 : index
      %c0_20 = arith.constant 0 : index
      %32 = vector.load %arg8[%c0_19, %c0_20] : memref<8x128xf32, #tpu.memory_space<vmem>>, vector<8x128xf32>
      tpu.vector_store %arg8[%c0_19, %c0_20], %31 {strides = array<i32>} : memref<8x128xf32, #tpu.memory_space<vmem>>, vector<8x128xf32>,
    } else {
    }
    %c8_i32 = arith.constant 8 : i32
    %3 = arith.muli %arg0, %c8_i32 : i32
    %4 = tpu.iota {dimensions = array<i32: 0>} : vector<8x1xi32>
    %5 = vector.broadcast %3 : i32 to vector<8x1xi32>
    %6 = arith.addi %5, %4 : vector<8x1xi32>
    %c0 = arith.constant 0 : index
    %c0_1 = arith.constant 0 : index
    %7 = vector.load %arg2[%c0, %c0_1] : memref<1x128xi32, #tpu.memory_space<vmem>>, vector<1x128xi32>
    %8 = vector.broadcast %6 : vector<8x1xi32> to vector<8x128xi32>
    %9 = vector.broadcast %7 : vector<1x128xi32> to vector<8x128xi32>
    %10 = arith.cmpi eq, %8, %9 : vector<8x128xi32>
    %c0_2 = arith.constant 0 : index
    %c0_3 = arith.constant 0 : index
    %11 = vector.load %arg8[%c0_2, %c0_3] : memref<8x128xf32, #tpu.memory_space<vmem>>, vector<8x128xf32>
    %12 = arith.extui %10 : vector<8x128xi1> to vector<8x128xi32>
    %13 = arith.sitofp %12 : vector<8x128xi32> to vector<8x128xf32>
    %cst = arith.constant dense<0.000000e+00> : vector<8xf32>
    %14 = vector.multi_reduction <add>, %13, %cst [1] : vector<8x128xf32> to vector<8xf32>
    %15 = vector.shape_cast %14 : vector<8xf32> to vector<8x1xf32>
    %16 = vector.broadcast %15 : vector<8x1xf32> to vector<8x128xf32>
    %17 = arith.addf %11, %16 : vector<8x128xf32>
    %c0_4 = arith.constant 0 : index
    %c0_5 = arith.constant 0 : index
    %18 = vector.load %arg8[%c0_4, %c0_5] : memref<8x128xf32, #tpu.memory_space<vmem>>, vector<8x128xf32>
    tpu.vector_store %arg8[%c0_4, %c0_5], %17 {strides = array<i32>} : memref<8x128xf32, #tpu.memory_space<vmem>>, vector<8x128xf32>,
    %c0_6 = arith.constant 0 : index
    %c0_7 = arith.constant 0 : index
    %19 = vector.load %arg7[%c0_6, %c0_7] : memref<8x128xf32, #tpu.memory_space<vmem>>, vector<8x128xf32>
    %20 = arith.extui %10 : vector<8x128xi1> to vector<8x128xi32>
    %21 = arith.sitofp %20 : vector<8x128xi32> to vector<8x128xf32>
    %c0_8 = arith.constant 0 : index
    %c0_9 = arith.constant 0 : index
    %22 = vector.load %arg3[%c0_8, %c0_9] : memref<128x128xf32, #tpu.memory_space<vmem>>, vector<128x128xf32>
    %cst_10 = arith.constant dense<0.000000e+00> : vector<8x128xf32>
    %23 = tpu.matmul %21, %22, %cst_10 {dimension_numbers = #tpu.dot_dimension_numbers<[1], [0], [0], [1], [0, 0, 1, 1], [], []>} : vector<8x128xf32>, vector<128x128xf32>, vector<8x128xf32> -> vector<8x128xf32>
    %24 = arith.addf %19, %23 : vector<8x128xf32>
    %c0_11 = arith.constant 0 : index
    %c0_12 = arith.constant 0 : index
    %25 = vector.load %arg7[%c0_11, %c0_12] : memref<8x128xf32, #tpu.memory_space<vmem>>, vector<8x128xf32>
    tpu.vector_store %arg7[%c0_11, %c0_12], %24 {strides = array<i32>} : memref<8x128xf32, #tpu.memory_space<vmem>>, vector<8x128xf32>,
    %c0_i32_13 = arith.constant 0 : i32
    %26 = arith.cmpi eq, %arg1, %c0_i32_13 : i32
    %27 = arith.extui %26 : i1 to i32
    %c0_i32_14 = arith.constant 0 : i32
    %28 = arith.cmpi ne, %27, %c0_i32_14 : i32
    scf.if %28 {
      %c0_15 = arith.constant 0 : index
      %c0_16 = arith.constant 0 : index
      %29 = vector.load %arg8[%c0_15, %c0_16] : memref<8x128xf32, #tpu.memory_space<vmem>>, vector<8x128xf32>
      %30 = vector.extract_strided_slice %29 {offsets = [0, 0], sizes = [8, 1], strides = [1, 1]} : vector<8x128xf32> to vector<8x1xf32>
      %cst_17 = arith.constant 1.000000e+00 : f32
      %31 = vector.broadcast %cst_17 : f32 to vector<8x1xf32>
      %32 = arith.maximumf %30, %31 : vector<8x1xf32>
      %33 = tpu.reciprocal %32 : vector<8x1xf32> -> vector<8x1xf32>
      %c0_18 = arith.constant 0 : index
      %c0_19 = arith.constant 0 : index
      %34 = vector.load %arg7[%c0_18, %c0_19] : memref<8x128xf32, #tpu.memory_space<vmem>>, vector<8x128xf32>
      %35 = vector.broadcast %33 : vector<8x1xf32> to vector<8x128xf32>
      %36 = arith.mulf %34, %35 : vector<8x128xf32>
      %c0_20 = arith.constant 0 : index
      %c0_21 = arith.constant 0 : index
      %37 = vector.load %arg4[%c0_20, %c0_21] : memref<128x128xf32, #tpu.memory_space<vmem>>, vector<128x128xf32>
      %cst_22 = arith.constant dense<0.000000e+00> : vector<8x128xf32>
      %38 = tpu.matmul %36, %37, %cst_22 {dimension_numbers = #tpu.dot_dimension_numbers<[1], [0], [0], [1], [0, 0, 1, 1], [], []>} : vector<8x128xf32>, vector<128x128xf32>, vector<8x128xf32> -> vector<8x128xf32>
      %c0_23 = arith.constant 0 : index
      %c0_24 = arith.constant 0 : index
      %39 = vector.load %arg5[%c0_23, %c0_24] : memref<1x128xf32, #tpu.memory_space<vmem>>, vector<1x128xf32>
      %40 = vector.broadcast %39 : vector<1x128xf32> to vector<8x128xf32>
      %41 = arith.addf %38, %40 : vector<8x128xf32>
      %c0_25 = arith.constant 0 : index
      %c0_26 = arith.constant 0 : index
      %42 = vector.load %arg6[%c0_25, %c0_26] : memref<8x128xf32, #tpu.memory_space<vmem>>, vector<8x128xf32>
      tpu.vector_store %arg6[%c0_25, %c0_26], %41 {strides = array<i32>} : memref<8x128xf32, #tpu.memory_space<vmem>>, vector<8x128xf32>,
    } else {
    }
    return
  }
  func.func @transform_0(%arg0: i32, %arg1: i32) -> (i32, i32) {
    %c0_i32 = arith.constant 0 : i32
    %c0_i32_0 = arith.constant 0 : i32
    return %c0_i32, %arg1 : i32, i32
  }
  func.func @transform_1(%arg0: i32, %arg1: i32) -> (i32, i32) {
    %c0_i32 = arith.constant 0 : i32
    %c0_i32_0 = arith.constant 0 : i32
    return %arg1, %c0_i32 : i32, i32
  }
  func.func @transform_2(%arg0: i32, %arg1: i32) -> (i32, i32) {
    %c0_i32 = arith.constant 0 : i32
    %c0_i32_0 = arith.constant 0 : i32
    %c0_i32_1 = arith.constant 0 : i32
    return %c0_i32, %c0_i32_0 : i32, i32
  }
  func.func @transform_3(%arg0: i32, %arg1: i32) -> (i32, i32) {
    %c0_i32 = arith.constant 0 : i32
    %c0_i32_0 = arith.constant 0 : i32
    %c0_i32_1 = arith.constant 0 : i32
    return %c0_i32, %c0_i32_0 : i32, i32
  }
  func.func @transform_4(%arg0: i32, %arg1: i32) -> (i32, i32) {
    %c0_i32 = arith.constant 0 : i32
    %c0_i32_0 = arith.constant 0 : i32
    return %arg0, %c0_i32 : i32, i32
  }
}

</mosaic_0001>

<llo_original>
// kernel: tpu_custom_call.1
$region0: #{tpu_custom_call.1}
  #allocation0 [shape = 'u32[]', space=smem, size = 0x4, offset = 0x4, fixed_abs, tag = 'smem constant byte address 0x4 - core index']
  #allocation1 [shape = 'u32[144,128]{1,0:T(1,128)}', space=vmem, size = 0x12000, scoped, tag = 'internal scratch']
  #allocation2 [shape = 'f32[8,128]{1,0:T(8,128)}', space=vmem, size = 0x1000, scoped, tag = 'scratch operand']
  #allocation3 [shape = 'f32[8,128]{1,0:T(8,128)}', space=vmem, size = 0x1000, scoped, tag = 'scratch operand']
  %s0 = inlined_call_operand.hbm [shape: s32[1,128], index: 0, kind: input, shape index: {}]
  %s1 = inlined_call_operand.hbm [shape: f32[128,128], index: 1, kind: input, shape index: {}]
  %s2 = inlined_call_operand.hbm [shape: f32[128,128], index: 2, kind: input, shape index: {}]
  %s3 = inlined_call_operand.vmem [shape: f32[1,128], index: 3, kind: input, shape index: {}]
  %s4 = inlined_call_operand.hbm [shape: f32[8,128], index: 4, kind: output, shape index: {}]
  %s5 = sld [smem:[#allocation0]]
  $region46: #{tpu_custom_call.1} parent=0
    _
  %s7 = ssub.s32 1, %s5
  %s8 = scalar_select 0, %s7, %s5
  $region1: #{tpu_custom_call.1} parent=0
    #allocation4 [shape = 'u8[512]{0}', space=vmem, size = 0x400, scoped, tag = 'input window, operand 0, single buffered']
    #allocation5 [shape = 's32[1]{0}', space=sflag, size = 0x4, scoped, tag = 'scoped memory for tpu_custom_call.1']
    #allocation6 [shape = 's32[1]{0}', space=sflag, size = 0x4, scoped, tag = 'scoped memory for tpu_custom_call.1']
    #allocation7 [shape = 'u8[65536]{0}', space=vmem, size = 0x10000, scoped, tag = 'input window, operand 1, single buffered']
    #allocation8 [shape = 's32[1]{0}', space=sflag, size = 0x4, scoped, tag = 'scoped memory for tpu_custom_call.1']
    #allocation9 [shape = 'u8[65536]{0}', space=vmem, size = 0x10000, scoped, tag = 'input window, operand 2, single buffered']
    #allocation10 [shape = 'u8[4096]{0}', space=vmem, size = 0x1000, scoped, tag = 'output window, operand 0, single buffered']
    %9 = vsyncpa [#allocation5], 0
    %10 = vsyncpa [#allocation8], 0
    %11 = vsyncpa [#allocation6], 0
    // Predicated region
    $region2: #{tpu_custom_call.1} parent=1 // pred_check
      _
    $region3: #{tpu_custom_call.1} parent=1 // pred_check_branch
      %13 = sbr.rel (0) target = $region5
    $region4: #{tpu_custom_call.1} parent=1 // pred_region
      %s15 = ssub.s32 16, 16
      %16 = vsyncadd [#allocation5], %s15
      %s18 = sshll.u32 [#allocation4], 4
      %s19 = int_to_ptr.vmem [resolvable:$true] %s18
      %21 = dma.hbm_to_vmem [thread:$0]  %s0, 16, %s19, [#allocation5]
    $region5: #{tpu_custom_call.1} parent=1 // pred_fallthru
      _
    // Predicated region
    $region6: #{tpu_custom_call.1} parent=1 // pred_check
      _
    $region7: #{tpu_custom_call.1} parent=1 // pred_check_branch
      %23 = sbr.rel (0) target = $region9
    $region8: #{tpu_custom_call.1} parent=1 // pred_region
      %s25 = ssub.s32 2048, 2048
      %26 = vsyncadd [#allocation8], %s25
      %s27 = sshll.u32 [#allocation7], 4
      %s28 = int_to_ptr.vmem [resolvable:$true] %s27
      %33 = dma.hbm_to_vmem [thread:$0]  %s1, 2048, %s28, [#allocation8], 128, 128, 8
    $region9: #{tpu_custom_call.1} parent=1 // pred_fallthru
      _
    // Predicated region
    $region10: #{tpu_custom_call.1} parent=1 // pred_check
      _
    $region11: #{tpu_custom_call.1} parent=1 // pred_check_branch
      %35 = sbr.rel (0) target = $region13
    $region12: #{tpu_custom_call.1} parent=1 // pred_region
      %s37 = ssub.s32 2048, 2048
      %38 = vsyncadd [#allocation8], %s37
      %s39 = sshll.u32 [#allocation9], 4
      %s40 = int_to_ptr.vmem [resolvable:$true] %s39
      %45 = dma.hbm_to_vmem [thread:$0]  %s2, 2048, %s40, [#allocation8], 128, 128, 8
    $region13: #{tpu_custom_call.1} parent=1 // pred_fallthru
      _
    // Predicated region
    $region14: #{tpu_custom_call.1} parent=1 // pred_check
      _
    $region15: #{tpu_custom_call.1} parent=1 // pred_check_branch
      %47 = sbr.rel (0) target = $region17
    $region16: #{tpu_custom_call.1} parent=1 // pred_region
      _
    $region17: #{tpu_custom_call.1} parent=1 // pred_fallthru
      _
    // Predicated region
    $region18: #{tpu_custom_call.1} parent=1 // pred_check
      _
    $region19: #{tpu_custom_call.1} parent=1 // pred_check_branch
      %49 = sbr.rel (0) target = $region21
    $region20: #{tpu_custom_call.1} parent=1 // pred_region
      %50 = dma.done [#allocation5], 16
    $region21: #{tpu_custom_call.1} parent=1 // pred_fallthru
      _
    // Predicated region
    $region22: #{tpu_custom_call.1} parent=1 // pred_check
      _
    $region23: #{tpu_custom_call.1} parent=1 // pred_check_branch
      %52 = sbr.rel (0) target = $region25
    $region24: #{tpu_custom_call.1} parent=1 // pred_region
      %53 = dma.done [#allocation8], 2048
    $region25: #{tpu_custom_call.1} parent=1 // pred_fallthru
      _
    // Predicated region
    $region26: #{tpu_custom_call.1} parent=1 // pred_check
      _
    $region27: #{tpu_custom_call.1} parent=1 // pred_check_branch
      %55 = sbr.rel (0) target = $region29
    $region28: #{tpu_custom_call.1} parent=1 // pred_region
      %56 = dma.done [#allocation8], 2048
    $region29: #{tpu_custom_call.1} parent=1 // pred_fallthru
      _
    %p57 = scmp.eq.s32.totalorder 0, 0
    // Predicated region
    $region30: #{tpu_custom_call.1} parent=1 // pred_check
      %p58 = pneg %p57
    $region31: #{tpu_custom_call.1} parent=1 // pred_check_branch
      %60 = sbr.rel (%p58) target = $region33
    $region32: #{tpu_custom_call.1} parent=1 // pred_region
      %61 = vst [vmem:[#allocation2] sm:$0xff] 0.0
      %62 = vst [vmem:[#allocation3] sm:$0xff] 0.0
    $region33: #{tpu_custom_call.1} parent=1 // pred_fallthru
      _
    %s63 = smul.u32 0, 8
    %v64 = vlaneseq
    %v65 = vshrl.u32 %v64, 7
    %v66 = vstv %s63
    %v67 = vadd.s32 %v66, %v65
    %v68 = vld [vmem:[#allocation4] sm:$0x1]
    %v69 = vlaneseq
    %v70 = vshrl.u32 %v69, 7
    %v71 = vsub.s32 0, %v70
    %v72 = vrot.slane %v68, %v71
    %vm73 = vcmp.eq.s32.totalorder %v67, %v72
    %v74 = vld [vmem:[#allocation3] sm:$0xff]
    %v75 = vsel %vm73, 1, 0
    %v76 = vcvt.s32.f32 %v75
    %77 = vadd.xlane.f32.xlu0 %v76
    %v78 = vpop.xlane.xlu0 %77
    %v79 = vadd.f32 %v74, %v78
    %80 = vst [vmem:[#allocation3] sm:$0xff] %v79
    %v81 = vld [vmem:[#allocation2] sm:$0xff]
    %v82 = vld [vmem:[#allocation7] sm:$0xff]
    %v83 = vld [vmem:[#allocation7 + $0x8] sm:$0xff]
    %v84 = vld [vmem:[#allocation7 + $0x10] sm:$0xff]
    %v85 = vld [vmem:[#allocation7 + $0x18] sm:$0xff]
    %v86 = vld [vmem:[#allocation7 + $0x20] sm:$0xff]
    %v87 = vld [vmem:[#allocation7 + $0x28] sm:$0xff]
    %v88 = vld [vmem:[#allocation7 + $0x30] sm:$0xff]
    %v89 = vld [vmem:[#allocation7 + $0x38] sm:$0xff]
    %v90 = vld [vmem:[#allocation7 + $0x40] sm:$0xff]
    %v91 = vld [vmem:[#allocation7 + $0x48] sm:$0xff]
    %v92 = vld [vmem:[#allocation7 + $0x50] sm:$0xff]
    %v93 = vld [vmem:[#allocation7 + $0x58] sm:$0xff]
    %v94 = vld [vmem:[#allocation7 + $0x60] sm:$0xff]
    %v95 = vld [vmem:[#allocation7 + $0x68] sm:$0xff]
    %v96 = vld [vmem:[#allocation7 + $0x70] sm:$0xff]
    %v97 = vld [vmem:[#allocation7 + $0x78] sm:$0xff]
    %98 = vmatprep.subr.mxu0 0.0
    %99 = vmatpush1.msra.mxu0 %v97
    %100 = vmatprep.subr.mxu0 0.0
    %101 = vmatpush1.msra.mxu0 %v96
    %102 = vmatprep.subr.mxu0 0.0
    %103 = vmatpush1.msra.mxu0 %v95
    %104 = vmatprep.subr.mxu0 0.0
    %105 = vmatpush1.msra.mxu0 %v94
    %106 = vmatprep.subr.mxu0 0.0
    %107 = vmatpush1.msra.mxu0 %v93
    %108 = vmatprep.subr.mxu0 0.0
    %109 = vmatpush1.msra.mxu0 %v92
    %110 = vmatprep.subr.mxu0 0.0
    %111 = vmatpush1.msra.mxu0 %v91
    %112 = vmatprep.subr.mxu0 0.0
    %113 = vmatpush1.msra.mxu0 %v90
    %114 = vmatprep.subr.mxu0 0.0
    %115 = vmatpush1.msra.mxu0 %v89
    %116 = vmatprep.subr.mxu0 0.0
    %117 = vmatpush1.msra.mxu0 %v88
    %118 = vmatprep.subr.mxu0 0.0
    %119 = vmatpush1.msra.mxu0 %v87
    %120 = vmatprep.subr.mxu0 0.0
    %121 = vmatpush1.msra.mxu0 %v86
    %122 = vmatprep.subr.mxu0 0.0
    %123 = vmatpush1.msra.mxu0 %v85
    %124 = vmatprep.subr.mxu0 0.0
    %125 = vmatpush1.msra.mxu0 %v84
    %126 = vmatprep.subr.mxu0 0.0
    %127 = vmatpush1.msra.mxu0 %v83
    %128 = vmatprep.subr.mxu0 0.0
    %129 = vmatpush1.msra.mxu0 %v82
    %130 = vmatprep.subr.mxu0 0.0
    %131 = vmatpush2.msra.mxu0 0.0
    %132 = vmatprep.subr.mxu0 0.0
    %133 = vmatpush2.msra.mxu0 0.0
    %134 = vmatprep.subr.mxu0 0.0
    %135 = vmatpush2.msra.mxu0 0.0
    %136 = vmatprep.subr.mxu0 0.0
    %137 = vmatpush2.msra.mxu0 0.0
    %138 = vmatprep.subr.mxu0 0.0
    %139 = vmatpush2.msra.mxu0 0.0
    %140 = vmatprep.subr.mxu0 0.0
    %141 = vmatpush2.msra.mxu0 0.0
    %142 = vmatprep.subr.mxu0 0.0
    %143 = vmatpush2.msra.mxu0 0.0
    %144 = vmatprep.subr.mxu0 0.0
    %145 = vmatpush2.msra.mxu0 0.0
    %146 = vmatprep.subr.mxu0 0.0
    %147 = vmatpush2.msra.mxu0 0.0
    %148 = vmatprep.subr.mxu0 0.0
    %149 = vmatpush2.msra.mxu0 0.0
    %150 = vmatprep.subr.mxu0 0.0
    %151 = vmatpush2.msra.mxu0 0.0
    %152 = vmatprep.subr.mxu0 0.0
    %153 = vmatpush2.msra.mxu0 0.0
    %154 = vmatprep.subr.mxu0 0.0
    %155 = vmatpush2.msra.mxu0 0.0
    %156 = vmatprep.subr.mxu0 0.0
    %157 = vmatpush2.msra.mxu0 0.0
    %158 = vmatprep.subr.mxu0 0.0
    %159 = vmatpush2.msra.mxu0 0.0
    %160 = vmatprep.subr.mxu0 0.0
    %161 = vmatpush2.msra.mxu0 0.0
    %162 = vmatprep.mubr.f32.mxu0 0.0
    %163 = vmatmul.mubr.f32.gmra.mxu0 %v76
    %v164 = vpop.f32.mrf.mxu0
    %v165 = vadd.f32 0.0, %v164
    %v166 = vpop.f32.mrf.mxu0
    %167 = vdwg.mxu0
    %v168 = vadd.f32 %v81, %v165
    %169 = vst [vmem:[#allocation2] sm:$0xff] %v168
    // Predicated region
    $region34: #{tpu_custom_call.1} parent=1 // pred_check
      %p170 = pneg %p57
    $region35: #{tpu_custom_call.1} parent=1 // pred_check_branch
      %172 = sbr.rel (%p170) target = $region37
    $region36: #{tpu_custom_call.1} parent=1 // pred_region
      %v173 = vld [vmem:[#allocation3] sm:$0xff]
      %v174 = vmax.f32 %v173, 1.0
      %v175 = vrcp.pop %v174
      %v176 = vld [vmem:[#allocation2] sm:$0xff]
      %178 = vset.pattern.permute.xlu0 0
      %179 = vperm.xlu0 %178, %v175
      %v180 = vpop.permute.xlu0 %179
      %v182 = vmul.f32 %v176, %v180
      %v183 = vld [vmem:[#allocation9] sm:$0xff]
      %v184 = vld [vmem:[#allocation9 + $0x8] sm:$0xff]
      %v185 = vld [vmem:[#allocation9 + $0x10] sm:$0xff]
      %v186 = vld [vmem:[#allocation9 + $0x18] sm:$0xff]
      %v187 = vld [vmem:[#allocation9 + $0x20] sm:$0xff]
      %v188 = vld [vmem:[#allocation9 + $0x28] sm:$0xff]
      %v189 = vld [vmem:[#allocation9 + $0x30] sm:$0xff]
      %v190 = vld [vmem:[#allocation9 + $0x38] sm:$0xff]
      %v191 = vld [vmem:[#allocation9 + $0x40] sm:$0xff]
      %v192 = vld [vmem:[#allocation9 + $0x48] sm:$0xff]
      %v193 = vld [vmem:[#allocation9 + $0x50] sm:$0xff]
      %v194 = vld [vmem:[#allocation9 + $0x58] sm:$0xff]
      %v195 = vld [vmem:[#allocation9 + $0x60] sm:$0xff]
      %v196 = vld [vmem:[#allocation9 + $0x68] sm:$0xff]
      %v197 = vld [vmem:[#allocation9 + $0x70] sm:$0xff]
      %v198 = vld [vmem:[#allocation9 + $0x78] sm:$0xff]
      %v199 = vld [vmem:[%s3] sm:$0x1]
      %v201 = vlaneseq
      %v202 = vshrl.u32 %v201, 7
      %v203 = vsub.s32 0, %v202
      %v204 = vrot.slane %v199, %v203
      %206 = vmatprep.subr.mxu0 0.0
      %207 = vmatpush1.msra.mxu0 %v198
      %208 = vmatprep.subr.mxu0 0.0
      %209 = vmatpush1.msra.mxu0 %v197
      %210 = vmatprep.subr.mxu0 0.0
      %211 = vmatpush1.msra.mxu0 %v196
      %212 = vmatprep.subr.mxu0 0.0
      %213 = vmatpush1.msra.mxu0 %v195
      %214 = vmatprep.subr.mxu0 0.0
      %215 = vmatpush1.msra.mxu0 %v194
      %216 = vmatprep.subr.mxu0 0.0
      %217 = vmatpush1.msra.mxu0 %v193
      %218 = vmatprep.subr.mxu0 0.0
      %219 = vmatpush1.msra.mxu0 %v192
      %220 = vmatprep.subr.mxu0 0.0
      %221 = vmatpush1.msra.mxu0 %v191
      %222 = vmatprep.subr.mxu0 0.0
      %223 = vmatpush1.msra.mxu0 %v190
      %224 = vmatprep.subr.mxu0 0.0
      %225 = vmatpush1.msra.mxu0 %v189
      %226 = vmatprep.subr.mxu0 0.0
      %227 = vmatpush1.msra.mxu0 %v188
      %228 = vmatprep.subr.mxu0 0.0
      %229 = vmatpush1.msra.mxu0 %v187
      %230 = vmatprep.subr.mxu0 0.0
      %231 = vmatpush1.msra.mxu0 %v186
      %232 = vmatprep.subr.mxu0 0.0
      %233 = vmatpush1.msra.mxu0 %v185
      %234 = vmatprep.subr.mxu0 0.0
      %235 = vmatpush1.msra.mxu0 %v184
      %236 = vmatprep.subr.mxu0 0.0
      %237 = vmatpush1.msra.mxu0 %v183
      %238 = vmatprep.subr.mxu0 0.0
      %239 = vmatpush2.msra.mxu0 0.0
      %240 = vmatprep.subr.mxu0 0.0
      %241 = vmatpush2.msra.mxu0 0.0
      %242 = vmatprep.subr.mxu0 0.0
      %243 = vmatpush2.msra.mxu0 0.0
      %244 = vmatprep.subr.mxu0 0.0
      %245 = vmatpush2.msra.mxu0 0.0
      %246 = vmatprep.subr.mxu0 0.0
      %247 = vmatpush2.msra.mxu0 0.0
      %248 = vmatprep.subr.mxu0 0.0
      %249 = vmatpush2.msra.mxu0 0.0
      %250 = vmatprep.subr.mxu0 0.0
      %251 = vmatpush2.msra.mxu0 0.0
      %252 = vmatprep.subr.mxu0 0.0
      %253 = vmatpush2.msra.mxu0 0.0
      %254 = vmatprep.subr.mxu0 0.0
      %255 = vmatpush2.msra.mxu0 0.0
      %256 = vmatprep.subr.mxu0 0.0
      %257 = vmatpush2.msra.mxu0 0.0
      %258 = vmatprep.subr.mxu0 0.0
      %259 = vmatpush2.msra.mxu0 0.0
      %260 = vmatprep.subr.mxu0 0.0
      %261 = vmatpush2.msra.mxu0 0.0
      %262 = vmatprep.subr.mxu0 0.0
      %263 = vmatpush2.msra.mxu0 0.0
      %264 = vmatprep.subr.mxu0 0.0
      %265 = vmatpush2.msra.mxu0 0.0
      %266 = vmatprep.subr.mxu0 0.0
      %267 = vmatpush2.msra.mxu0 0.0
      %268 = vmatprep.subr.mxu0 0.0
      %269 = vmatpush2.msra.mxu0 0.0
      %270 = vmatprep.mubr.f32.mxu0 0.0
      %271 = vmatmul.mubr.f32.gmra.mxu0 %v182
      %v272 = vpop.f32.mrf.mxu0
      %v273 = vadd.f32 %v204, %v272
      %v274 = vpop.f32.mrf.mxu0
      %275 = vdwg.mxu0
      %276 = vst [vmem:[#allocation10] sm:$0xff] %v273
    $region37: #{tpu_custom_call.1} parent=1 // pred_fallthru
      _
    // Predicated region
    $region38: #{tpu_custom_call.1} parent=1 // pred_check
      _
    $region39: #{tpu_custom_call.1} parent=1 // pred_check_branch
      %278 = sbr.rel (0) target = $region41
    $region40: #{tpu_custom_call.1} parent=1 // pred_region
      %s280 = ssub.s32 128, 128
      %281 = vsyncadd [#allocation6], %s280
      %s283 = sshll.u32 [#allocation10], 4
      %s284 = int_to_ptr.vmem [resolvable:$true] %s283
      %286 = dma.vmem_to_hbm [thread:$0]  %s284, 128, %s4, [#allocation6]
    $region41: #{tpu_custom_call.1} parent=1 // pred_fallthru
      _
    // Predicated region
    $region42: #{tpu_custom_call.1} parent=1 // pred_check
      _
    $region43: #{tpu_custom_call.1} parent=1 // pred_check_branch
      %288 = sbr.rel (0) target = $region45
    $region44: #{tpu_custom_call.1} parent=1 // pred_region
      %289 = dma.done [#allocation6], 128
    $region45: #{tpu_custom_call.1} parent=1 // pred_fallthru
      _
    %290 = vsyncpa [#allocation5], 1
    %291 = vsyncpa [#allocation8], 1
    %292 = vsyncpa [#allocation6], 1

</llo_original>
